<compile_context>
chip_gen: v6e
topology: v6e:2x2x1
jax: 0.10.0
libtpu: 0.0.40
codegen_flags: <defaults>
</compile_context>

<pallas_src>
import math
import functools

import jax
import jax.numpy as jnp
from jax.experimental import pallas as pl
from jax.experimental.pallas import tpu as pltpu


# ----------------------------------------------------------------------------
# Buffer construction: exact reproduction of the PyTorch `pe` table.
# ----------------------------------------------------------------------------
def make_positional_encoding(d_model, max_seq_len, dtype=jnp.float32):
    pos = jnp.arange(max_seq_len, dtype=jnp.float32)[:, None]          # (L, 1)
    even = jnp.arange(0, d_model, 2, dtype=jnp.float32)[None, :]       # even column indices i
    sin_part = jnp.sin(pos / jnp.power(10000.0, 2.0 * even / d_model))
    cos_part = jnp.cos(pos / jnp.power(10000.0, 2.0 * (even + 1.0) / d_model))
    # interleave: column 2k -> sin term k, column 2k+1 -> cos term k
    pe = jnp.stack([sin_part, cos_part], axis=-1).reshape(max_seq_len, d_model)
    return pe.astype(dtype)


# ----------------------------------------------------------------------------
# Kernels
# ----------------------------------------------------------------------------
def _pos_enc_kernel(x_ref, pe_ref, o_ref, *, scale):
    # out = x * sqrt(d_model) + pe
    # Works for both block layouts:
    #   x (ts, Dd)      + pe (ts, Dd)     (tiled path)
    #   x (B, Sd, Dd)   + pe (Sd, Dd)     (single-block path, pe broadcasts over B)
    o_ref[...] = x_ref[...] * scale + pe_ref[...]


def _pos_enc_decode_kernel(step_ref, x_ref, pe_ref, o_ref, *, scale, row_block):
    # pe_ref holds the `row_block` PE rows containing row (step - 1); pick it out.
    r = (step_ref[0] - 1) % row_block
    row = pe_ref[pl.ds(r, 1), :]                      # (1, D)
    o_ref[...] = x_ref[...] * scale + row[None]       # (B, 1, D) + (1, 1, D)


# ----------------------------------------------------------------------------
# Tiling helper
# ----------------------------------------------------------------------------
def _rows_per_block(num_rows, row_bytes, *, sublane=8, target_bytes=4 << 20):
    """Rows per block: full extent if it fits the budget, else the largest
    sublane-aligned row count within ~target_bytes. Non-divisible extents are
    handled by a pl.cdiv grid with a masked tail block (no oversized fallback)."""
    if num_rows * row_bytes <= target_bytes:
        return int(num_rows)
    rows = max(sublane, (target_bytes // row_bytes) // sublane * sublane)
    return int(min(rows, num_rows))


# ----------------------------------------------------------------------------
# Wrapper
# ----------------------------------------------------------------------------
def positional_encoder(x, pe, *, step=None):
    """x: (B, S, d_model). pe: (max_seq_len, d_model) precomputed table.

    Matches PositionalEncoder.forward (dropout is identity: eval mode)."""
    B, S, D = x.shape
    scale = math.sqrt(D)
    pe = pe.astype(x.dtype)              # never mix dtypes inside the kernel
    itemsize = x.dtype.itemsize

    # ---------------- decode path: S == 1 with an explicit step -------------
    if S == 1 and step is not None:
        max_seq_len = pe.shape[0]
        row_block = 8 if max_seq_len >= 8 else max_seq_len
        step_arr = jnp.atleast_1d(jnp.asarray(step, jnp.int32))

        xo_spec = pl.BlockSpec((B, 1, D), lambda i, step_ref: (0, 0, 0))
        pe_spec = pl.BlockSpec(
            (row_block, D),
            lambda i, step_ref: ((step_ref[0] - 1) // row_block, 0))

        grid_spec = pltpu.PrefetchScalarGridSpec(
            num_scalar_prefetch=1, grid=(1,),
            in_specs=[xo_spec, pe_spec], out_specs=xo_spec)

        return pl.pallas_call(
            functools.partial(_pos_enc_decode_kernel, scale=scale,
                              row_block=row_block),
            out_shape=jax.ShapeDtypeStruct((B, 1, D), x.dtype),
            grid_spec=grid_spec,
            compiler_params=pltpu.CompilerParams(
                dimension_semantics=("arbitrary",)),
        )(step_arr, x, pe)

    # ---------------- full-sequence path -------------------------------------
    pe_rows = pe[:S]                      # the exact rows the module adds

    # Lane-dense re-layout when d_model under-fills the 128-wide lane axis.
    if D % 128 != 0 and (S * D) % 128 == 0:
        Sd, Dd = (S * D) // 128, 128
        x_in = x.reshape(B, Sd, Dd)
        pe_in = pe_rows.reshape(Sd, Dd)   # row-major flatten keeps batch broadcast exact
    else:
        Sd, Dd = S, D
        x_in, pe_in = x, pe_rows

    row_bytes = Dd * itemsize
    block_budget = 4 << 20                # ~4 MiB blocks: near HBM roofline on all gens

    if B * Sd * row_bytes <= block_budget:
        # Tiny problem: one whole-array block, one grid step (no per-step overhead).
        grid = (1,)
        x_spec = pl.BlockSpec((B, Sd, Dd), lambda i: (0, 0, 0))
        pe_spec = pl.BlockSpec((Sd, Dd), lambda i: (0, 0))
        semantics = ("arbitrary",)
        per_iter_bytes = (2 * B * Sd + Sd) * row_bytes
    else:
        ts = _rows_per_block(Sd, row_bytes, target_bytes=block_budget)
        # Batch innermost ("arbitrary") so pe's block index is constant across
        # consecutive steps -> pe tile stays resident; seq axis outer/"parallel"
        # so megacore (v7x 2 TCs) can shard the tiles.
        grid = (pl.cdiv(Sd, ts), B)
        x_spec = pl.BlockSpec((pl.Squeezed(), ts, Dd), lambda s, b: (b, s, 0))
        pe_spec = pl.BlockSpec((ts, Dd), lambda s, b: (s, 0))
        semantics = ("parallel", "arbitrary")
        per_iter_bytes = 3 * ts * row_bytes

    # 2x per-step footprint (double-buffering) + headroom; clamp well under
    # v7x's 64 MiB physical VMEM.
    vmem_limit = int(min(max(2 * per_iter_bytes + (2 << 20), 16 << 20), 48 << 20))

    out = pl.pallas_call(
        functools.partial(_pos_enc_kernel, scale=scale),
        out_shape=jax.ShapeDtypeStruct(x_in.shape, x.dtype),
        grid=grid,
        in_specs=[x_spec, pe_spec],
        out_specs=x_spec,
        compiler_params=pltpu.CompilerParams(
            dimension_semantics=semantics,
            vmem_limit_bytes=vmem_limit),
    )(x_in, pe_in)
    return out.reshape(B, S, D)


# ----------------------------------------------------------------------------
# Pure-JAX reference (same math, no Pallas) for a correctness check.
# ----------------------------------------------------------------------------
def positional_encoder_ref(x, pe, step=None):
    S, D = x.shape[1], x.shape[2]
    if S == 1 and step is not None:
        pe_slice = pe[step - 1:step]
    else:
        pe_slice = pe[:S]
    return x * math.sqrt(D) + pe_slice[None].astype(x.dtype)


if __name__ == "__main__":
    d_model, max_seq_len, dropout_p = 32, 64, 0.1   # dropout_p unused: eval-mode identity
    B, S = 2, 8

    key = jax.random.PRNGKey(0)
    x = jax.random.normal(key, (B, S, d_model), jnp.float32)
    pe = make_positional_encoding(d_model, max_seq_len)

    # full-sequence path (exercises the lane-dense (B, S*D/128, 128) layout)
    out = positional_encoder(x, pe)
    jax.block_until_ready(out)
    assert out.shape == (B, S, d_model)
    ref = positional_encoder_ref(x, pe)
    assert jnp.allclose(out, ref, rtol=1e-6, atol=1e-6)

    # single-token decode path (seq_len == 1 with explicit step), as in the module
    x1 = jax.random.normal(jax.random.PRNGKey(1), (B, 1, d_model), jnp.float32)
    out1 = positional_encoder(x1, pe, step=5)
    jax.block_until_ready(out1)
    ref1 = positional_encoder_ref(x1, pe, step=5)
    assert jnp.allclose(out1, ref1, rtol=1e-6, atol=1e-6)

    print("KERNEL_OK")
</pallas_src>

<mosaic_0001>
module attributes {stable_mosaic.version = 11 : i64} {
  func.func @_pos_enc_kernel(%arg0: i32, %arg1: memref<2x2x128xf32, #tpu.memory_space<vmem>>, %arg2: memref<2x128xf32, #tpu.memory_space<vmem>>, %arg3: memref<2x2x128xf32, #tpu.memory_space<vmem>>) attributes {dimension_semantics = [#tpu.dimension_semantics<arbitrary>], iteration_bounds = array<i64: 1>, scalar_prefetch = 0 : i64, scratch_operands = 0 : i64, tpu.core_type = #tpu.core_type<tc>, window_params = [{pipeline_mode = #tpu.pipeline_mode<synchronous>, transform_indices = @transform_0, window_bounds = array<i64: 2, 2, 128>}, {pipeline_mode = #tpu.pipeline_mode<synchronous>, transform_indices = @transform_1, window_bounds = array<i64: 2, 128>}, {pipeline_mode = #tpu.pipeline_mode<synchronous>, transform_indices = @transform_2, window_bounds = array<i64: 2, 2, 128>}]} {
    %c0 = arith.constant 0 : index
    %c0_0 = arith.constant 0 : index
    %c0_1 = arith.constant 0 : index
    %0 = vector.load %arg1[%c0, %c0_0, %c0_1] : memref<2x2x128xf32, #tpu.memory_space<vmem>>, vector<2x2x128xf32>
    %cst = arith.constant 5.65685415 : f32
    %1 = vector.broadcast %cst : f32 to vector<2x2x128xf32>
    %2 = arith.mulf %0, %1 : vector<2x2x128xf32>
    %c0_2 = arith.constant 0 : index
    %c0_3 = arith.constant 0 : index
    %3 = vector.load %arg2[%c0_2, %c0_3] : memref<2x128xf32, #tpu.memory_space<vmem>>, vector<2x128xf32>
    %4 = vector.shape_cast %3 : vector<2x128xf32> to vector<1x2x128xf32>
    %5 = vector.broadcast %4 : vector<1x2x128xf32> to vector<2x2x128xf32>
    %6 = arith.addf %2, %5 : vector<2x2x128xf32>
    %c0_4 = arith.constant 0 : index
    %c0_5 = arith.constant 0 : index
    %c0_6 = arith.constant 0 : index
    %7 = vector.load %arg3[%c0_4, %c0_5, %c0_6] : memref<2x2x128xf32, #tpu.memory_space<vmem>>, vector<2x2x128xf32>
    tpu.vector_store %arg3[%c0_4, %c0_5, %c0_6], %6 {strides = array<i32>} : memref<2x2x128xf32, #tpu.memory_space<vmem>>, vector<2x2x128xf32>,
    return
  }
  func.func @transform_0(%arg0: i32) -> (i32, i32, i32) {
    %c0_i32 = arith.constant 0 : i32
    %c0_i32_0 = arith.constant 0 : i32
    %c0_i32_1 = arith.constant 0 : i32
    %c0_i32_2 = arith.constant 0 : i32
    return %c0_i32, %c0_i32_0, %c0_i32_1 : i32, i32, i32
  }
  func.func @transform_1(%arg0: i32) -> (i32, i32) {
    %c0_i32 = arith.constant 0 : i32
    %c0_i32_0 = arith.constant 0 : i32
    %c0_i32_1 = arith.constant 0 : i32
    return %c0_i32, %c0_i32_0 : i32, i32
  }
  func.func @transform_2(%arg0: i32) -> (i32, i32, i32) {
    %c0_i32 = arith.constant 0 : i32
    %c0_i32_0 = arith.constant 0 : i32
    %c0_i32_1 = arith.constant 0 : i32
    %c0_i32_2 = arith.constant 0 : i32
    return %c0_i32, %c0_i32_0, %c0_i32_1 : i32, i32, i32
  }
}

</mosaic_0001>

<llo_original>
// kernel: tpu_custom_call.1
$region0: #{tpu_custom_call.1}
  #allocation0 [shape = 'u32[]', space=smem, size = 0x4, offset = 0x4, fixed_abs, tag = 'smem constant byte address 0x4 - core index']
  #allocation1 [shape = 'u32[144,128]{1,0:T(1,128)}', space=vmem, size = 0x12000, scoped, tag = 'internal scratch']
  %s0 = inlined_call_operand.hbm [shape: f32[2,2,128], index: 0, kind: input, shape index: {}]
  %s1 = inlined_call_operand.hbm [shape: f32[2,128], index: 1, kind: input, shape index: {}]
  %s2 = inlined_call_operand.hbm [shape: f32[2,2,128], index: 2, kind: output, shape index: {}]
  %s3 = sld [smem:[#allocation0]]
  $region26: #{tpu_custom_call.1} parent=0
    _
  %s5 = ssub.s32 1, %s3
  %s6 = scalar_select 0, %s5, %s3
  $region1: #{tpu_custom_call.1} parent=0
    #allocation2 [shape = 'u8[2048]{0}', space=vmem, size = 0x800, scoped, tag = 'input window, operand 0, single buffered']
    #allocation3 [shape = 's32[1]{0}', space=sflag, size = 0x4, scoped, tag = 'scoped memory for tpu_custom_call.1']
    #allocation4 [shape = 's32[1]{0}', space=sflag, size = 0x4, scoped, tag = 'scoped memory for tpu_custom_call.1']
    #allocation5 [shape = 'u8[1024]{0}', space=vmem, size = 0x400, scoped, tag = 'input window, operand 1, single buffered']
    #allocation6 [shape = 's32[1]{0}', space=sflag, size = 0x4, scoped, tag = 'scoped memory for tpu_custom_call.1']
    #allocation7 [shape = 'u8[2048]{0}', space=vmem, size = 0x800, scoped, tag = 'output window, operand 0, single buffered']
    %7 = vsyncpa [#allocation3], 0
    %8 = vsyncpa [#allocation6], 0
    %9 = vsyncpa [#allocation4], 0
    // Predicated region
    $region2: #{tpu_custom_call.1} parent=1 // pred_check
      _
    $region3: #{tpu_custom_call.1} parent=1 // pred_check_branch
      %11 = sbr.rel (0) target = $region5
    $region4: #{tpu_custom_call.1} parent=1 // pred_region
      %s13 = ssub.s32 64, 64
      %14 = vsyncadd [#allocation3], %s13
      %s15 = sshll.u32 [#allocation2], 4
      %s16 = int_to_ptr.vmem [resolvable:$true] %s15
      %21 = dma.hbm_to_vmem [thread:$0]  %s0, 64, %s16, [#allocation3], 32, 32, 2
    $region5: #{tpu_custom_call.1} parent=1 // pred_fallthru
      _
    // Predicated region
    $region6: #{tpu_custom_call.1} parent=1 // pred_check
      _
    $region7: #{tpu_custom_call.1} parent=1 // pred_check_branch
      %23 = sbr.rel (0) target = $region9
    $region8: #{tpu_custom_call.1} parent=1 // pred_region
      %s25 = ssub.s32 32, 32
      %26 = vsyncadd [#allocation6], %s25
      %s28 = sshll.u32 [#allocation5], 4
      %s29 = int_to_ptr.vmem [resolvable:$true] %s28
      %31 = dma.hbm_to_vmem [thread:$0]  %s1, 32, %s29, [#allocation6]
    $region9: #{tpu_custom_call.1} parent=1 // pred_fallthru
      _
    // Predicated region
    $region10: #{tpu_custom_call.1} parent=1 // pred_check
      _
    $region11: #{tpu_custom_call.1} parent=1 // pred_check_branch
      %33 = sbr.rel (0) target = $region13
    $region12: #{tpu_custom_call.1} parent=1 // pred_region
      %34 = dma.done [#allocation3], 64
    $region13: #{tpu_custom_call.1} parent=1 // pred_fallthru
      _
    // Predicated region
    $region14: #{tpu_custom_call.1} parent=1 // pred_check
      _
    $region15: #{tpu_custom_call.1} parent=1 // pred_check_branch
      %36 = sbr.rel (0) target = $region17
    $region16: #{tpu_custom_call.1} parent=1 // pred_region
      %37 = dma.done [#allocation6], 32
    $region17: #{tpu_custom_call.1} parent=1 // pred_fallthru
      _
    %v38 = vld [vmem:[#allocation2] sm:$0x3]
    %v39 = vld [vmem:[#allocation2 + $0x2] sm:$0x3]
    %v40 = vmul.f32 %v38, 5.656854
    %v41 = vmul.f32 %v39, 5.656854
    %v42 = vld [vmem:[#allocation5] sm:$0x3]
    %v43 = vadd.f32 %v40, %v42
    %v44 = vadd.f32 %v41, %v42
    %45 = vst [vmem:[#allocation7] sm:$0x3] %v43
    %46 = vst [vmem:[#allocation7 + $0x2] sm:$0x3] %v44
    // Predicated region
    $region18: #{tpu_custom_call.1} parent=1 // pred_check
      _
    $region19: #{tpu_custom_call.1} parent=1 // pred_check_branch
      %48 = sbr.rel (0) target = $region21
    $region20: #{tpu_custom_call.1} parent=1 // pred_region
      %s50 = ssub.s32 64, 64
      %51 = vsyncadd [#allocation4], %s50
      %s52 = sshll.u32 [#allocation7], 4
      %s53 = int_to_ptr.vmem [resolvable:$true] %s52
      %58 = dma.vmem_to_hbm [thread:$0]  %s53, 64, %s2, [#allocation4], 32, 32, 2
    $region21: #{tpu_custom_call.1} parent=1 // pred_fallthru
      _
    // Predicated region
    $region22: #{tpu_custom_call.1} parent=1 // pred_check
      _
    $region23: #{tpu_custom_call.1} parent=1 // pred_check_branch
      %60 = sbr.rel (0) target = $region25
    $region24: #{tpu_custom_call.1} parent=1 // pred_region
      %61 = dma.done [#allocation4], 64
    $region25: #{tpu_custom_call.1} parent=1 // pred_fallthru
      _
    %62 = vsyncpa [#allocation3], 1
    %63 = vsyncpa [#allocation6], 1
    %64 = vsyncpa [#allocation4], 1

</llo_original>
